<compile_context>
chip_gen: v6e
topology: v6e:2x2x1
jax: 0.10.0
libtpu: 0.0.40
codegen_flags: <defaults>
</compile_context>

<pallas_src>
import functools

import jax
import jax.numpy as jnp
from jax.experimental import pallas as pl
from jax.experimental.pallas import tpu as pltpu


# ---------------------------------------------------------------------------
# generation-aware sizing helpers
# ---------------------------------------------------------------------------
def _vmem_budget():
    """Scoped-VMEM budget: ~70% of physical, clamped to [32 MiB, 100 MiB]."""
    cap = 128 * 1024 * 1024
    try:
        info = pltpu.get_tpu_info()
        cap = int(getattr(info, "vmem_capacity_bytes", cap))
    except Exception:
        pass
    return max(32 * 1024 * 1024, min(int(cap * 0.7), 100 * 1024 * 1024))


def _pick_row_tile(M, target=1024):
    """Row tile for flattened (rows, C) matmuls. Ragged tails are handled by
    Pallas partial blocks (rows are independent; reductions are masked)."""
    return M if M <= target else target


def _pick_band(H, W, Cin, Cout, n_rates, d_max, budget):
    """Tallest H-band whose double-buffered band + weights + acc fit VMEM."""
    Wb = W + 2 * d_max
    w_bytes = 2 * max(n_rates, 1) * 9 * Cin * Cout * 2     # pipeline double-buffers
    for Ht in range(min(H, 64), 0, -1):
        band = 2 * (Ht + 2 * d_max) * Wb * Cin * 2          # 2 slots, bf16
        acc = Ht * W * Cout * 4
        outs = 2 * max(n_rates, 1) * Ht * W * Cout * 2
        if w_bytes + band + acc + outs <= int(budget * 0.85):
            return Ht
    return 1


# ---------------------------------------------------------------------------
# kernel: branch 0 (1x1 conv + BN + ReLU) fused with global-average-pool branch
# ---------------------------------------------------------------------------
def _b0_pool_kernel(x_ref, w0_ref, b0_ref, wp_ref, bp_ref, wpr_ref, bpr_ref,
                    y0_ref, pbias_ref, sum_ref, *, hw, tm, need_mask):
    # x: (1, TM, Cin) bf16    w0/wp: (Cin, Cout) bf16    wpr: (Cout, Cout) bf16
    # y0 block: (1, TM, Cout) bf16   pbias block: (1, 1, Cout) f32
    # sum_ref: (1, Cin) f32 per-batch pool partial sum
    c = pl.program_id(1)

    @pl.when(c == 0)
    def _():
        sum_ref[...] = jnp.zeros_like(sum_ref)

    x = x_ref[0]                                                    # (TM, Cin)
    # branch 0: 1x1 conv (+folded BN) + ReLU
    y = jnp.dot(x, w0_ref[...], preferred_element_type=jnp.float32)
    y0_ref[0] = jnp.maximum(y + b0_ref[...], 0.0).astype(y0_ref.dtype)

    # global-pool partial sums (mask padded rows of the trailing partial block)
    xf = x.astype(jnp.float32)
    if need_mask:
        row = jax.lax.broadcasted_iota(jnp.int32, (tm, 1), 0) + c * tm
        xf = jnp.where(row < hw, xf, 0.0)
    sum_ref[...] += jnp.sum(xf, axis=0, keepdims=True)

    @pl.when(c == pl.num_programs(1) - 1)
    def _():
        xm = sum_ref[...] * (1.0 / hw)                              # (1, Cin)
        yp = jnp.dot(xm, wp_ref[...].astype(jnp.float32),
                     preferred_element_type=jnp.float32)
        yp = jnp.maximum(yp + bp_ref[...], 0.0).astype(jnp.bfloat16)
        # fold the pooled branch through its projection slice -> per-batch bias
        pb = jnp.dot(yp, wpr_ref[...], preferred_element_type=jnp.float32)
        pbias_ref[0] = pb + bpr_ref[...]


def b0_pool_fused(x_flat, w0, b0, wp, bp, wproj_pool, bproj, tm, vmem_limit):
    N, HW, Cin = x_flat.shape
    Cout = w0.shape[1]
    n_chunks = -(-HW // tm)
    kern = functools.partial(_b0_pool_kernel, hw=HW, tm=tm,
                             need_mask=(HW % tm != 0))
    return pl.pallas_call(
        kern,
        out_shape=(jax.ShapeDtypeStruct((N, HW, Cout), jnp.bfloat16),
                   jax.ShapeDtypeStruct((N, 1, Cout), jnp.float32)),
        grid_spec=pltpu.PrefetchScalarGridSpec(
            num_scalar_prefetch=0, grid=(N, n_chunks),
            in_specs=[pl.BlockSpec((1, tm, Cin), lambda n, c: (n, c, 0)),
                      pl.BlockSpec((Cin, Cout), lambda n, c: (0, 0)),
                      pl.BlockSpec((1, Cout), lambda n, c: (0, 0)),
                      pl.BlockSpec((Cin, Cout), lambda n, c: (0, 0)),
                      pl.BlockSpec((1, Cout), lambda n, c: (0, 0)),
                      pl.BlockSpec((Cout, Cout), lambda n, c: (0, 0)),
                      pl.BlockSpec((1, Cout), lambda n, c: (0, 0))],
            out_specs=[pl.BlockSpec((1, tm, Cout), lambda n, c: (n, c, 0)),
                       pl.BlockSpec((1, 1, Cout), lambda n, c: (n, 0, 0))],
            scratch_shapes=[pltpu.VMEM((1, Cin), jnp.float32)]),
        compiler_params=pltpu.CompilerParams(
            dimension_semantics=("parallel", "arbitrary"),
            vmem_limit_bytes=vmem_limit),
    )(x_flat, w0, b0.reshape(1, Cout), wp, bp.reshape(1, Cout),
      wproj_pool, bproj.reshape(1, Cout))


# ---------------------------------------------------------------------------
# kernel: all atrous 3x3 branches fused, double-buffered halo-band DMA
# ---------------------------------------------------------------------------
def _atrous_fused_kernel(*refs, rates, d_max, W, Ht, Cin, Cout, nHb, N):
    n_r = len(rates)
    xpad_hbm, w_ref, b_ref = refs[0], refs[1], refs[2]
    o_refs = refs[3:3 + n_r]
    band_ref, sem_ref, acc_ref = refs[3 + n_r:]

    n = pl.program_id(0)
    hb = pl.program_id(1)
    step = n * nHb + hb
    total = N * nHb
    slot = jax.lax.rem(step, 2)
    Hb = Ht + 2 * d_max

    def band_copy(nn, hh, sl):
        return pltpu.make_async_copy(
            xpad_hbm.at[nn, pl.ds(hh * Ht, Hb), :, :],
            band_ref.at[sl], sem_ref.at[sl])

    # prime the very first band
    @pl.when(step == 0)
    def _():
        band_copy(n, hb, slot).start()

    # prefetch the next band into the other slot (overlaps with this step's MXU)
    @pl.when(step + 1 < total)
    def _():
        nxt = step + 1
        n2 = nxt // nHb
        h2 = jax.lax.rem(nxt, nHb)
        band_copy(n2, h2, 1 - slot).start()

    band_copy(n, hb, slot).wait()
    bs = band_ref.at[slot]

    # TODO(synk): kx*d offsets are generally not 8-aligned; over-aligned tap
    # windows would avoid per-tap relayout copies on v6e/v7x.
    for r, d in enumerate(rates):
        off = d_max - d
        first = True
        for ky in range(3):
            for kx in range(3):
                patch = bs[off + ky * d: off + ky * d + Ht,
                           off + kx * d: off + kx * d + W, :]
                contrib = jnp.dot(patch.reshape(Ht * W, Cin),
                                  w_ref[r, ky * 3 + kx],
                                  preferred_element_type=jnp.float32)
                if first:
                    acc_ref[...] = contrib
                    first = False
                else:
                    acc_ref[...] += contrib
        o_refs[r][0] = jnp.maximum(acc_ref[...] + b_ref[r, :], 0.0
                                   ).astype(o_refs[r].dtype).reshape(Ht, W, Cout)


def atrous_fused(xpad, w_stack, b_stack, rates, d_max, H, W, Ht, vmem_limit):
    N = xpad.shape[0]
    Cin = xpad.shape[-1]
    n_r, _, _, Cout = w_stack.shape
    nHb = -(-H // Ht)
    Hb = Ht + 2 * d_max
    Wb = W + 2 * d_max
    kern = functools.partial(_atrous_fused_kernel, rates=tuple(int(r) for r in rates),
                             d_max=d_max, W=W, Ht=Ht, Cin=Cin, Cout=Cout,
                             nHb=nHb, N=N)
    out_shapes = tuple(jax.ShapeDtypeStruct((N, H, W, Cout), jnp.bfloat16)
                       for _ in rates)
    out_specs = [pl.BlockSpec((1, Ht, W, Cout), lambda n, hb: (n, hb, 0, 0))
                 for _ in rates]
    outs = pl.pallas_call(
        kern,
        out_shape=out_shapes,
        grid_spec=pltpu.PrefetchScalarGridSpec(
            num_scalar_prefetch=0, grid=(N, nHb),
            in_specs=[pl.BlockSpec(memory_space=pl.ANY),
                      pl.BlockSpec((n_r, 9, Cin, Cout), lambda n, hb: (0, 0, 0, 0)),
                      pl.BlockSpec((n_r, Cout), lambda n, hb: (0, 0))],
            out_specs=out_specs,
            scratch_shapes=[pltpu.VMEM((2, Hb, Wb, Cin), jnp.bfloat16),
                            pltpu.SemaphoreType.DMA((2,)),
                            pltpu.VMEM((Ht * W, Cout), jnp.float32)]),
        compiler_params=pltpu.CompilerParams(
            # keep the grid strictly sequential so the manual prefetch chain is
            # valid (measured cost of arbitrary vs parallel is ~0 on a single TC)
            dimension_semantics=("arbitrary", "arbitrary"),
            vmem_limit_bytes=vmem_limit),
    )(xpad, w_stack, b_stack)
    return list(outs)


# ---------------------------------------------------------------------------
# kernel: fused concat + 1x1 projection (+folded BN) + ReLU, bf16 output
# ---------------------------------------------------------------------------
def _fused_proj_kernel(*args, nb):
    # args = (y_0..y_{nb-1}, pool_bias, w_stack, out, acc)
    #   y_b: (1, TM, Cout) bf16      pool_bias: (1, 1, Cout) f32 (per-batch)
    #   w_stack: (nb, Cout, Cout) bf16    out: (1, TM, Cout) bf16
    #   acc: (TM, Cout) f32 VMEM scratch
    y_refs = args[:nb]
    pbias_ref, w_ref, o_ref, acc_ref = args[nb:]
    acc_ref[...] = jnp.dot(y_refs[0][0], w_ref[0],
                           preferred_element_type=jnp.float32) + pbias_ref[0]
    for i in range(1, nb):
        acc_ref[...] += jnp.dot(y_refs[i][0], w_ref[i],
                                preferred_element_type=jnp.float32)
    o_ref[0] = jnp.maximum(acc_ref[...], 0.0).astype(o_ref.dtype)


def fused_projection(ys, pool_bias, w_sp, tm, vmem_limit):
    N, HW, Cout = ys[0].shape
    nb = len(ys)
    n_chunks = -(-HW // tm)
    kern = functools.partial(_fused_proj_kernel, nb=nb)
    y_specs = [pl.BlockSpec((1, tm, Cout), lambda n, i: (n, i, 0)) for _ in ys]
    return pl.pallas_call(
        kern,
        out_shape=jax.ShapeDtypeStruct((N, HW, Cout), jnp.bfloat16),
        grid_spec=pltpu.PrefetchScalarGridSpec(
            num_scalar_prefetch=0, grid=(N, n_chunks),
            in_specs=y_specs + [
                pl.BlockSpec((1, 1, Cout), lambda n, i: (n, 0, 0)),
                pl.BlockSpec((nb, Cout, Cout), lambda n, i: (0, 0, 0))],
            out_specs=pl.BlockSpec((1, tm, Cout), lambda n, i: (n, i, 0)),
            scratch_shapes=[pltpu.VMEM((tm, Cout), jnp.float32)]),
        compiler_params=pltpu.CompilerParams(
            dimension_semantics=("parallel", "parallel"),
            vmem_limit_bytes=vmem_limit),
    )(*ys, pool_bias, w_sp)


# ---------------------------------------------------------------------------
# ASPP forward (NCHW in/out to match the PyTorch module)
# ---------------------------------------------------------------------------
def aspp_forward(x_nchw, pp):
    N, Cin, H, W = x_nchw.shape
    HW = H * W
    Cout = pp['b0']['w'].shape[1]
    budget = _vmem_budget()

    x_nhwc = jnp.transpose(x_nchw, (0, 2, 3, 1)).astype(jnp.bfloat16)
    x_flat = x_nhwc.reshape(N, HW, Cin)

    w_stack = pp['proj']['w_stack']               # (n_branches, Cout, Cout)
    w_sp = w_stack[:-1]                           # spatial-branch slices
    w_pool_proj = w_stack[-1]                     # pooled-branch slice

    tm = _pick_row_tile(HW)

    # branch 0 (1x1 conv) fused with the global-average-pool branch
    y0, pool_bias = b0_pool_fused(
        x_flat, pp['b0']['w'], pp['b0']['b'], pp['pool']['w'], pp['pool']['b'],
        w_pool_proj, pp['proj']['b'], tm, budget)
    ys = [y0]

    # all atrous branches in one fused pass over a single padded activation
    rates = pp['rates']
    if rates:
        d_max = max(rates)
        Ht = _pick_band(H, W, Cin, Cout, len(rates), d_max, budget)
        nHb = -(-H // Ht)
        Hp = nHb * Ht
        xpad = jnp.pad(x_nhwc,
                       ((0, 0), (d_max, d_max + (Hp - H)), (d_max, d_max), (0, 0)))
        ats = atrous_fused(xpad, pp['atrous_w'], pp['atrous_b'],
                           rates, d_max, H, W, Ht, budget)
        ys.extend(a.reshape(N, HW, Cout) for a in ats)

    # fused concat + projection; pooled branch enters as a per-batch bias
    # (bilinear upsample of a 1x1 map is a constant, absorbed into that bias)
    out = fused_projection(ys, pool_bias, w_sp, tm, budget)
    out = out.reshape(N, H, W, Cout).transpose(0, 3, 1, 2).astype(jnp.float32)
    return out


# ---------------------------------------------------------------------------
# Parameters: raw init (BN in eval mode) + prep (fold scale, cast to bf16)
# ---------------------------------------------------------------------------
def _bn_fold(key, C, eps=1e-5):
    k1, k2, k3, k4 = jax.random.split(key, 4)
    gamma = jax.random.uniform(k1, (C,), minval=0.5, maxval=1.5)
    beta = 0.1 * jax.random.normal(k2, (C,))
    mean = 0.1 * jax.random.normal(k3, (C,))
    var = jax.random.uniform(k4, (C,), minval=0.5, maxval=1.5)
    scale = gamma / jnp.sqrt(var + eps)
    bias = beta - mean * scale
    return scale.astype(jnp.float32), bias.astype(jnp.float32)


def init_params(key, in_channels, atrous_rates, out_channels):
    keys = jax.random.split(key, 2 * (len(atrous_rates) + 3))
    ki = iter(keys)
    params = {}

    s, b = _bn_fold(next(ki), out_channels)
    params['b0'] = {'w': (jax.random.normal(next(ki), (in_channels, out_channels))
                          / jnp.sqrt(in_channels)).astype(jnp.float32),
                    's': s, 'b': b}

    params['atrous'] = []
    for r in atrous_rates:
        s, b = _bn_fold(next(ki), out_channels)
        w = (jax.random.normal(next(ki), (9, in_channels, out_channels))
             / jnp.sqrt(9 * in_channels)).astype(jnp.float32)
        params['atrous'].append({'w': w, 's': s, 'b': b, 'rate': int(r)})

    s, b = _bn_fold(next(ki), out_channels)
    params['pool'] = {'w': (jax.random.normal(next(ki), (in_channels, out_channels))
                            / jnp.sqrt(in_channels)).astype(jnp.float32),
                      's': s, 'b': b}

    nb = len(atrous_rates) + 2
    s, b = _bn_fold(next(ki), out_channels)
    params['proj'] = {'w': (jax.random.normal(next(ki), (nb * out_channels, out_channels))
                            / jnp.sqrt(nb * out_channels)).astype(jnp.float32),
                      's': s, 'b': b}
    return params


def prepare_params(params):
    """Fold BN scale into weights, cast weights to bf16, stack per-rate tensors."""
    def fold(w, s):
        return (w * s).astype(jnp.bfloat16)

    pp = {'b0': {'w': fold(params['b0']['w'], params['b0']['s']),
                 'b': params['b0']['b']},
          'pool': {'w': fold(params['pool']['w'], params['pool']['s']),
                   'b': params['pool']['b']}}

    rates = [p['rate'] for p in params['atrous']]
    pp['rates'] = rates
    if rates:
        pp['atrous_w'] = jnp.stack([fold(p['w'], p['s']) for p in params['atrous']])
        pp['atrous_b'] = jnp.stack([p['b'] for p in params['atrous']])
    else:
        pp['atrous_w'] = None
        pp['atrous_b'] = None

    wproj = params['proj']['w'] * params['proj']['s']          # (nb*Cout, Cout)
    Cout = wproj.shape[1]
    nbt = wproj.shape[0] // Cout
    pp['proj'] = {'w_stack': wproj.reshape(nbt, Cout, Cout).astype(jnp.bfloat16),
                  'b': params['proj']['b']}
    return pp


# ---------------------------------------------------------------------------
# Pure-JAX reference (lax conv) mirroring the bf16 casts of the Pallas path
# ---------------------------------------------------------------------------
def ref_forward(x_nchw, pp):
    f32 = lambda a: a.astype(jnp.float32)
    x = f32(x_nchw.astype(jnp.bfloat16))

    def conv(xx, w_oihw, dil, pad):
        return jax.lax.conv_general_dilated(
            xx, w_oihw, (1, 1), [(pad, pad), (pad, pad)],
            rhs_dilation=(dil, dil), dimension_numbers=("NCHW", "OIHW", "NCHW"),
            precision=jax.lax.Precision.HIGHEST)

    def bias_relu(y, b):
        return jnp.maximum(y + b[None, :, None, None], 0.0)

    N, Cin, H, W = x.shape
    Cout = pp['b0']['w'].shape[1]
    outs = []

    p = pp['b0']
    outs.append(bias_relu(conv(x, f32(p['w']).T.reshape(Cout, Cin, 1, 1), 1, 0),
                          p['b']))
    for i, r in enumerate(pp['rates']):
        w = f32(pp['atrous_w'][i]).reshape(3, 3, Cin, Cout).transpose(3, 2, 0, 1)
        outs.append(bias_relu(conv(x, w, r, r), pp['atrous_b'][i]))

    p = pp['pool']
    xm = jnp.mean(x, axis=(2, 3), keepdims=True)
    yp = bias_relu(conv(xm, f32(p['w']).T.reshape(Cout, Cin, 1, 1), 1, 0), p['b'])
    outs.append(jnp.broadcast_to(yp, (N, Cout, H, W)))

    # mirror bf16 storage of branch outputs before the projection
    cat = f32(jnp.concatenate(outs, axis=1).astype(jnp.bfloat16))
    p = pp['proj']
    wproj = f32(p['w_stack']).reshape(-1, Cout)                 # branch-ordered rows
    y = bias_relu(conv(cat, wproj.T.reshape(Cout, -1, 1, 1), 1, 0), p['b'])
    return f32(y.astype(jnp.bfloat16))                          # mirror bf16 output


# ---------------------------------------------------------------------------
if __name__ == "__main__":
    key = jax.random.PRNGKey(0)
    kx, kp = jax.random.split(key)

    N, Cin, H, W = 2, 4, 16, 16
    out_channels = 8
    atrous_rates = [1, 2]

    x = jax.random.normal(kx, (N, Cin, H, W), dtype=jnp.float32)
    raw = init_params(kp, Cin, atrous_rates, out_channels)
    pp = prepare_params(raw)

    out = jax.block_until_ready(aspp_forward(x, pp))
    ref = jax.block_until_ready(ref_forward(x, pp))

    assert out.shape == (N, out_channels, H, W), out.shape
    max_err = float(jnp.max(jnp.abs(out - ref)))
    assert jnp.allclose(out, ref, rtol=1e-2, atol=1e-2), max_err

    print("KERNEL_OK")
</pallas_src>

<mosaic_0001>
module attributes {stable_mosaic.version = 11 : i64} {
  func.func @_b0_pool_kernel(%arg0: i32, %arg1: i32, %arg2: memref<1x256x4xbf16, #tpu.memory_space<vmem>>, %arg3: memref<4x8xbf16, #tpu.memory_space<vmem>>, %arg4: memref<1x8xf32, #tpu.memory_space<vmem>>, %arg5: memref<4x8xbf16, #tpu.memory_space<vmem>>, %arg6: memref<1x8xf32, #tpu.memory_space<vmem>>, %arg7: memref<8x8xbf16, #tpu.memory_space<vmem>>, %arg8: memref<1x8xf32, #tpu.memory_space<vmem>>, %arg9: memref<1x256x8xbf16, #tpu.memory_space<vmem>>, %arg10: memref<1x1x8xf32, #tpu.memory_space<vmem>>, %arg11: memref<1x4xf32, #tpu.memory_space<vmem>>) attributes {dimension_semantics = [#tpu.dimension_semantics<parallel>, #tpu.dimension_semantics<arbitrary>], iteration_bounds = array<i64: 2, 1>, scalar_prefetch = 0 : i64, scratch_operands = 1 : i64, tpu.core_type = #tpu.core_type<tc>, window_params = [{transform_indices = @transform_0, window_bounds = array<i64: 1, 256, 4>}, {pipeline_mode = #tpu.pipeline_mode<synchronous>, transform_indices = @transform_1, window_bounds = array<i64: 4, 8>}, {pipeline_mode = #tpu.pipeline_mode<synchronous>, transform_indices = @transform_2, window_bounds = array<i64: 1, 8>}, {pipeline_mode = #tpu.pipeline_mode<synchronous>, transform_indices = @transform_3, window_bounds = array<i64: 4, 8>}, {pipeline_mode = #tpu.pipeline_mode<synchronous>, transform_indices = @transform_4, window_bounds = array<i64: 1, 8>}, {pipeline_mode = #tpu.pipeline_mode<synchronous>, transform_indices = @transform_5, window_bounds = array<i64: 8, 8>}, {pipeline_mode = #tpu.pipeline_mode<synchronous>, transform_indices = @transform_6, window_bounds = array<i64: 1, 8>}, {transform_indices = @transform_7, window_bounds = array<i64: 1, 256, 8>}, {transform_indices = @transform_8, window_bounds = array<i64: 1, 1, 8>}]} {
    %c0_i32 = arith.constant 0 : i32
    %0 = arith.cmpi eq, %arg1, %c0_i32 : i32
    %1 = arith.extui %0 : i1 to i32
    %c0_i32_0 = arith.constant 0 : i32
    %2 = arith.cmpi ne, %1, %c0_i32_0 : i32
    scf.if %2 {
      %cst_18 = arith.constant 0.000000e+00 : f32
      %25 = vector.broadcast %cst_18 : f32 to vector<1x4xf32>
      %c0_19 = arith.constant 0 : index
      %c0_20 = arith.constant 0 : index
      %26 = vector.load %arg11[%c0_19, %c0_20] : memref<1x4xf32, #tpu.memory_space<vmem>>, vector<1x4xf32>
      tpu.vector_store %arg11[%c0_19, %c0_20], %25 {strides = array<i32>} : memref<1x4xf32, #tpu.memory_space<vmem>>, vector<1x4xf32>,
    } else {
    }
    %c0 = arith.constant 0 : index
    %c0_1 = arith.constant 0 : index
    %c0_2 = arith.constant 0 : index
    %3 = vector.load %arg2[%c0, %c0_1, %c0_2] : memref<1x256x4xbf16, #tpu.memory_space<vmem>>, vector<1x256x4xbf16>
    %4 = vector.shape_cast %3 : vector<1x256x4xbf16> to vector<256x4xbf16>
    %c0_3 = arith.constant 0 : index
    %c0_4 = arith.constant 0 : index
    %5 = vector.load %arg3[%c0_3, %c0_4] : memref<4x8xbf16, #tpu.memory_space<vmem>>, vector<4x8xbf16>
    %cst = arith.constant dense<0.000000e+00> : vector<256x8xf32>
    %6 = tpu.matmul %4, %5, %cst {dimension_numbers = #tpu.dot_dimension_numbers<[1], [0], [0], [1], [0, 0, 1, 1], [], []>} : vector<256x4xbf16>, vector<4x8xbf16>, vector<256x8xf32> -> vector<256x8xf32>
    %c0_5 = arith.constant 0 : index
    %c0_6 = arith.constant 0 : index
    %7 = vector.load %arg4[%c0_5, %c0_6] : memref<1x8xf32, #tpu.memory_space<vmem>>, vector<1x8xf32>
    %8 = vector.broadcast %7 : vector<1x8xf32> to vector<256x8xf32>
    %9 = arith.addf %6, %8 : vector<256x8xf32>
    %cst_7 = arith.constant 0.000000e+00 : f32
    %10 = vector.broadcast %cst_7 : f32 to vector<256x8xf32>
    %11 = arith.maximumf %9, %10 : vector<256x8xf32>
    %12 = arith.truncf %11 : vector<256x8xf32> to vector<256x8xbf16>
    %c0_8 = arith.constant 0 : index
    %c0_9 = arith.constant 0 : index
    %c0_10 = arith.constant 0 : index
    %13 = vector.load %arg9[%c0_8, %c0_9, %c0_10] : memref<1x256x8xbf16, #tpu.memory_space<vmem>>, vector<1x256x8xbf16>
    %14 = vector.shape_cast %13 : vector<1x256x8xbf16> to vector<256x8xbf16>
    %15 = vector.shape_cast %12 : vector<256x8xbf16> to vector<1x256x8xbf16>
    tpu.vector_store %arg9[%c0_8, %c0_9, %c0_10], %15 {strides = array<i32>} : memref<1x256x8xbf16, #tpu.memory_space<vmem>>, vector<1x256x8xbf16>,
    %16 = arith.extf %4 : vector<256x4xbf16> to vector<256x4xf32>
    %c0_11 = arith.constant 0 : index
    %c0_12 = arith.constant 0 : index
    %17 = vector.load %arg11[%c0_11, %c0_12] : memref<1x4xf32, #tpu.memory_space<vmem>>, vector<1x4xf32>
    %cst_13 = arith.constant dense<0.000000e+00> : vector<4xf32>
    %18 = vector.multi_reduction <add>, %16, %cst_13 [0] : vector<256x4xf32> to vector<4xf32>
    %19 = vector.shape_cast %18 : vector<4xf32> to vector<1x4xf32>
    %20 = arith.addf %17, %19 : vector<1x4xf32>
    %c0_14 = arith.constant 0 : index
    %c0_15 = arith.constant 0 : index
    %21 = vector.load %arg11[%c0_14, %c0_15] : memref<1x4xf32, #tpu.memory_space<vmem>>, vector<1x4xf32>
    tpu.vector_store %arg11[%c0_14, %c0_15], %20 {strides = array<i32>} : memref<1x4xf32, #tpu.memory_space<vmem>>, vector<1x4xf32>,
    %c0_i32_16 = arith.constant 0 : i32
    %22 = arith.cmpi eq, %arg1, %c0_i32_16 : i32
    %23 = arith.extui %22 : i1 to i32
    %c0_i32_17 = arith.constant 0 : i32
    %24 = arith.cmpi ne, %23, %c0_i32_17 : i32
    scf.if %24 {
      %c0_18 = arith.constant 0 : index
      %c0_19 = arith.constant 0 : index
      %25 = vector.load %arg11[%c0_18, %c0_19] : memref<1x4xf32, #tpu.memory_space<vmem>>, vector<1x4xf32>
      %cst_20 = arith.constant 3.906250e-03 : f32
      %26 = vector.broadcast %cst_20 : f32 to vector<1x4xf32>
      %27 = arith.mulf %25, %26 : vector<1x4xf32>
      %c0_21 = arith.constant 0 : index
      %c0_22 = arith.constant 0 : index
      %28 = vector.load %arg5[%c0_21, %c0_22] : memref<4x8xbf16, #tpu.memory_space<vmem>>, vector<4x8xbf16>
      %29 = arith.extf %28 : vector<4x8xbf16> to vector<4x8xf32>
      %cst_23 = arith.constant dense<0.000000e+00> : vector<1x8xf32>
      %30 = tpu.matmul %27, %29, %cst_23 {dimension_numbers = #tpu.dot_dimension_numbers<[1], [0], [0], [1], [0, 0, 1, 1], [], []>} : vector<1x4xf32>, vector<4x8xf32>, vector<1x8xf32> -> vector<1x8xf32>
      %c0_24 = arith.constant 0 : index
      %c0_25 = arith.constant 0 : index
      %31 = vector.load %arg6[%c0_24, %c0_25] : memref<1x8xf32, #tpu.memory_space<vmem>>, vector<1x8xf32>
      %32 = arith.addf %30, %31 : vector<1x8xf32>
      %cst_26 = arith.constant 0.000000e+00 : f32
      %33 = vector.broadcast %cst_26 : f32 to vector<1x8xf32>
      %34 = arith.maximumf %32, %33 : vector<1x8xf32>
      %35 = arith.truncf %34 : vector<1x8xf32> to vector<1x8xbf16>
      %c0_27 = arith.constant 0 : index
      %c0_28 = arith.constant 0 : index
      %36 = vector.load %arg7[%c0_27, %c0_28] : memref<8x8xbf16, #tpu.memory_space<vmem>>, vector<8x8xbf16>
      %cst_29 = arith.constant dense<0.000000e+00> : vector<1x8xf32>
      %37 = tpu.matmul %35, %36, %cst_29 {dimension_numbers = #tpu.dot_dimension_numbers<[1], [0], [0], [1], [0, 0, 1, 1], [], []>} : vector<1x8xbf16>, vector<8x8xbf16>, vector<1x8xf32> -> vector<1x8xf32>
      %c0_30 = arith.constant 0 : index
      %c0_31 = arith.constant 0 : index
      %38 = vector.load %arg8[%c0_30, %c0_31] : memref<1x8xf32, #tpu.memory_space<vmem>>, vector<1x8xf32>
      %39 = arith.addf %37, %38 : vector<1x8xf32>
      %c0_32 = arith.constant 0 : index
      %c0_33 = arith.constant 0 : index
      %c0_34 = arith.constant 0 : index
      %40 = vector.load %arg10[%c0_32, %c0_33, %c0_34] : memref<1x1x8xf32, #tpu.memory_space<vmem>>, vector<1x1x8xf32>
      %41 = vector.shape_cast %40 : vector<1x1x8xf32> to vector<1x8xf32>
      %42 = vector.shape_cast %39 : vector<1x8xf32> to vector<1x1x8xf32>
      tpu.vector_store %arg10[%c0_32, %c0_33, %c0_34], %42 {strides = array<i32>} : memref<1x1x8xf32, #tpu.memory_space<vmem>>, vector<1x1x8xf32>,
    } else {
    }
    return
  }
  func.func @transform_0(%arg0: i32, %arg1: i32) -> (i32, i32, i32) {
    %c0_i32 = arith.constant 0 : i32
    %c0_i32_0 = arith.constant 0 : i32
    return %arg0, %arg1, %c0_i32 : i32, i32, i32
  }
  func.func @transform_1(%arg0: i32, %arg1: i32) -> (i32, i32) {
    %c0_i32 = arith.constant 0 : i32
    %c0_i32_0 = arith.constant 0 : i32
    %c0_i32_1 = arith.constant 0 : i32
    return %c0_i32, %c0_i32_0 : i32, i32
  }
  func.func @transform_2(%arg0: i32, %arg1: i32) -> (i32, i32) {
    %c0_i32 = arith.constant 0 : i32
    %c0_i32_0 = arith.constant 0 : i32
    %c0_i32_1 = arith.constant 0 : i32
    return %c0_i32, %c0_i32_0 : i32, i32
  }
  func.func @transform_3(%arg0: i32, %arg1: i32) -> (i32, i32) {
    %c0_i32 = arith.constant 0 : i32
    %c0_i32_0 = arith.constant 0 : i32
    %c0_i32_1 = arith.constant 0 : i32
    return %c0_i32, %c0_i32_0 : i32, i32
  }
  func.func @transform_4(%arg0: i32, %arg1: i32) -> (i32, i32) {
    %c0_i32 = arith.constant 0 : i32
    %c0_i32_0 = arith.constant 0 : i32
    %c0_i32_1 = arith.constant 0 : i32
    return %c0_i32, %c0_i32_0 : i32, i32
  }
  func.func @transform_5(%arg0: i32, %arg1: i32) -> (i32, i32) {
    %c0_i32 = arith.constant 0 : i32
    %c0_i32_0 = arith.constant 0 : i32
    %c0_i32_1 = arith.constant 0 : i32
    return %c0_i32, %c0_i32_0 : i32, i32
  }
  func.func @transform_6(%arg0: i32, %arg1: i32) -> (i32, i32) {
    %c0_i32 = arith.constant 0 : i32
    %c0_i32_0 = arith.constant 0 : i32
    %c0_i32_1 = arith.constant 0 : i32
    return %c0_i32, %c0_i32_0 : i32, i32
  }
  func.func @transform_7(%arg0: i32, %arg1: i32) -> (i32, i32, i32) {
    %c0_i32 = arith.constant 0 : i32
    %c0_i32_0 = arith.constant 0 : i32
    return %arg0, %arg1, %c0_i32 : i32, i32, i32
  }
  func.func @transform_8(%arg0: i32, %arg1: i32) -> (i32, i32, i32) {
    %c0_i32 = arith.constant 0 : i32
    %c0_i32_0 = arith.constant 0 : i32
    %c0_i32_1 = arith.constant 0 : i32
    return %arg0, %c0_i32, %c0_i32_0 : i32, i32, i32
  }
}

</mosaic_0001>

<llo_original>
// kernel: tpu_custom_call.1
$region0: #{tpu_custom_call.1}
  #allocation0 [shape = 'u32[]', space=smem, size = 0x4, offset = 0x4, fixed_abs, tag = 'smem constant byte address 0x4 - core index']
  #allocation1 [shape = 'u32[144,128]{1,0:T(1,128)}', space=vmem, size = 0x12000, scoped, tag = 'internal scratch']
  #allocation2 [shape = 'f32[1,4]{1,0:T(1,128)}', space=vmem, size = 0x200, scoped, tag = 'scratch operand']
  %s0 = inlined_call_operand.vmem [shape: bf16[2,256,4], index: 0, kind: input, shape index: {}]
  %s1 = inlined_call_operand.vmem [shape: bf16[4,8], index: 1, kind: input, shape index: {}]
  %s2 = inlined_call_operand.vmem [shape: f32[1,8], index: 2, kind: input, shape index: {}]
  %s3 = inlined_call_operand.vmem [shape: bf16[4,8], index: 3, kind: input, shape index: {}]
  %s4 = inlined_call_operand.vmem [shape: f32[1,8], index: 4, kind: input, shape index: {}]
  %s5 = inlined_call_operand.vmem [shape: bf16[8,8], index: 5, kind: input, shape index: {}]
  %s6 = inlined_call_operand.vmem [shape: f32[1,8], index: 6, kind: input, shape index: {}]
  %s7 = inlined_call_operand.vmem [shape: bf16[2,256,8], index: 7, kind: output, shape index: {0}]
  %s8 = inlined_call_operand.hbm [shape: f32[2,1,8], index: 8, kind: output, shape index: {1}]
  %9 = xla_tuple %s7, %s8
  %s10 = sld [smem:[#allocation0]]
  $region77: #{tpu_custom_call.1} parent=0
    _
  %s12 = ssub.s32 1, %s10
  %s13 = scalar_select 0, %s12, %s10
  $region1: #{tpu_custom_call.1} parent=0
    #allocation3 [shape = 'u8[1024]{0}', space=vmem, size = 0x400, scoped, tag = 'output window, operand 1']
    #allocation4 [shape = 's32[2]{0}', space=sflag, size = 0x8, scoped, tag = 'scoped memory for tpu_custom_call.1']
    %14 = vsyncpa [#allocation4], 0
    %s15 = scalar_lea.sflag [#allocation4], 1
    %16 = vsyncpa %s15, 0
    loop: start=0, step=1, limit=4
    $region2: #{tpu_custom_call.1} parent=1 // loop_pre_header
      _
    $region3: #{tpu_custom_call.1} parent=1 // loop_header
      %s18 = sphi 0, %s22
      %p19 = scmp.ge.s32.totalorder %s18, 4
      %s25 = sphi 0, %s37
      %s26 = sphi 0, %s33
      %s27 = sphi 0, %s25
      %s28 = sphi 0, %s26
      %s29 = sphi 0, %s27
      %s30 = sphi 0, %s28
      %s42 = sphi 0, %s44
      %s45 = sphi 0, %s42
      %s46 = sphi 0, %s45
      %s62 = sphi 0, %s46
      %s66 = sphi 0, %s66
      %s68 = sphi 0, %s66
      %s69 = sphi 0, %s68
      %s83 = sphi 0, %s69
      %s87 = sphi 0, %s87
      %s89 = sphi 0, %s87
      %s90 = sphi 0, %s89
      %s104 = sphi 0, %s90
      %s108 = sphi 0, %s108
      %s110 = sphi 0, %s108
      %s111 = sphi 0, %s110
      %s125 = sphi 0, %s111
      %s129 = sphi 0, %s129
      %s131 = sphi 0, %s129
      %s132 = sphi 0, %s131
      %s146 = sphi 0, %s132
      %s150 = sphi 0, %s150
      %s152 = sphi 0, %s150
      %s153 = sphi 0, %s152
      %s167 = sphi 0, %s153
      %s171 = sphi 0, %s171
      %s173 = sphi 0, %s171
      %s174 = sphi 0, %s173
      %s188 = sphi 0, %s174
      %s196 = sphi 0, %s198
      %s199 = sphi 0, %s196
      %s200 = sphi 0, %s199
      %s216 = sphi 0, %s200
      %s222 = sphi 0, %s224
      %s225 = sphi 0, %s222
      %s226 = sphi 0, %s225
      %s242 = sphi 0, %s226
    $region4: #{tpu_custom_call.1} parent=1 // loop_header_branch
      %21 = sbr.rel (%p19) target = $region8
    $region5: #{tpu_custom_call.1} parent=1 // loop_body
      %s23 = ssub.s32 %s18, 1
      %s24 = ssub.s32 %s18, 2
      %s31 = sadd.s32 1, %s26
      %p32 = scmp.ge.s32.totalorder %s31, 1
      %s33 = scalar_select %p32, 0, %s31
      %s34 = sadd.s32 1, %s25
      %s35 = scalar_select %p32, %s34, %s25
      %p36 = scmp.ge.s32.totalorder %s35, 2
      %s37 = scalar_select %p36, 0, %s35
      %s38 = ssub.s32 %s25, %s37
      %s39 = ssub.s32 %s26, %s33
      %s40 = sor.u32 %s38, %s39
      %p41 = scmp.eq.s32.totalorder %s40, 0
      %s43 = sadd.s32 %s42, 1
      %s44 = scalar_select %p41, %s42, %s43
      %p47 = pneg %p41
      %p48 = scmp.eq.s32.totalorder %s18, 1
      %p49 = por %p47, %p48
      %p50 = scmp.ne.s32.totalorder %s42, %s45
      %p51 = scmp.eq.s32.totalorder %s18, 0
      %p52 = por %p50, %p51
      %p53 = scmp.ne.s32.totalorder %s42, %s45
      %p54 = scmp.eq.s32.totalorder %s23, 1
      %p55 = por %p53, %p54
      %p56 = scmp.ne.s32.totalorder %s45, %s46
      %p57 = scmp.eq.s32.totalorder %s23, 0
      %p58 = por %p56, %p57
      %p59 = scmp.ne.s32.totalorder %s45, %s46
      %p60 = scmp.eq.s32.totalorder %s24, 1
      %p61 = por %p59, %p60
      %p63 = scmp.ne.s32.totalorder %s46, %s62
      %p64 = scmp.eq.s32.totalorder %s24, 0
      %p65 = por %p63, %p64
      %s67 = sadd.s32 %s66, 1
      %p70 = scmp.eq.s32.totalorder %s18, 1
      %p71 = scmp.ne.s32.totalorder %s66, %s68
      %p72 = scmp.eq.s32.totalorder %s18, 0
      %p73 = por %p71, %p72
      %p74 = scmp.ne.s32.totalorder %s66, %s68
      %p75 = scmp.eq.s32.totalorder %s23, 1
      %p76 = por %p74, %p75
      %p77 = scmp.ne.s32.totalorder %s68, %s69
      %p78 = scmp.eq.s32.totalorder %s23, 0
      %p79 = por %p77, %p78
      %p80 = scmp.ne.s32.totalorder %s68, %s69
      %p81 = scmp.eq.s32.totalorder %s24, 1
      %p82 = por %p80, %p81
      %p84 = scmp.ne.s32.totalorder %s69, %s83
      %p85 = scmp.eq.s32.totalorder %s24, 0
      %p86 = por %p84, %p85
      %s88 = sadd.s32 %s87, 1
      %p91 = scmp.eq.s32.totalorder %s18, 1
      %p92 = scmp.ne.s32.totalorder %s87, %s89
      %p93 = scmp.eq.s32.totalorder %s18, 0
      %p94 = por %p92, %p93
      %p95 = scmp.ne.s32.totalorder %s87, %s89
      %p96 = scmp.eq.s32.totalorder %s23, 1
      %p97 = por %p95, %p96
      %p98 = scmp.ne.s32.totalorder %s89, %s90
      %p99 = scmp.eq.s32.totalorder %s23, 0
      %p100 = por %p98, %p99
      %p101 = scmp.ne.s32.totalorder %s89, %s90
      %p102 = scmp.eq.s32.totalorder %s24, 1
      %p103 = por %p101, %p102
      %p105 = scmp.ne.s32.totalorder %s90, %s104
      %p106 = scmp.eq.s32.totalorder %s24, 0
      %p107 = por %p105, %p106
      %s109 = sadd.s32 %s108, 1
      %p112 = scmp.eq.s32.totalorder %s18, 1
      %p113 = scmp.ne.s32.totalorder %s108, %s110
      %p114 = scmp.eq.s32.totalorder %s18, 0
      %p115 = por %p113, %p114
      %p116 = scmp.ne.s32.totalorder %s108, %s110
      %p117 = scmp.eq.s32.totalorder %s23, 1
      %p118 = por %p116, %p117
      %p119 = scmp.ne.s32.totalorder %s110, %s111
      %p120 = scmp.eq.s32.totalorder %s23, 0
      %p121 = por %p119, %p120
      %p122 = scmp.ne.s32.totalorder %s110, %s111
      %p123 = scmp.eq.s32.totalorder %s24, 1
      %p124 = por %p122, %p123
      %p126 = scmp.ne.s32.totalorder %s111, %s125
      %p127 = scmp.eq.s32.totalorder %s24, 0
      %p128 = por %p126, %p127
      %s130 = sadd.s32 %s129, 1
      %p133 = scmp.eq.s32.totalorder %s18, 1
      %p134 = scmp.ne.s32.totalorder %s129, %s131
      %p135 = scmp.eq.s32.totalorder %s18, 0
      %p136 = por %p134, %p135
      %p137 = scmp.ne.s32.totalorder %s129, %s131
      %p138 = scmp.eq.s32.totalorder %s23, 1
      %p139 = por %p137, %p138
      %p140 = scmp.ne.s32.totalorder %s131, %s132
      %p141 = scmp.eq.s32.totalorder %s23, 0
      %p142 = por %p140, %p141
      %p143 = scmp.ne.s32.totalorder %s131, %s132
      %p144 = scmp.eq.s32.totalorder %s24, 1
      %p145 = por %p143, %p144
      %p147 = scmp.ne.s32.totalorder %s132, %s146
      %p148 = scmp.eq.s32.totalorder %s24, 0
      %p149 = por %p147, %p148
      %s151 = sadd.s32 %s150, 1
      %p154 = scmp.eq.s32.totalorder %s18, 1
      %p155 = scmp.ne.s32.totalorder %s150, %s152
      %p156 = scmp.eq.s32.totalorder %s18, 0
      %p157 = por %p155, %p156
      %p158 = scmp.ne.s32.totalorder %s150, %s152
      %p159 = scmp.eq.s32.totalorder %s23, 1
      %p160 = por %p158, %p159
      %p161 = scmp.ne.s32.totalorder %s152, %s153
      %p162 = scmp.eq.s32.totalorder %s23, 0
      %p163 = por %p161, %p162
      %p164 = scmp.ne.s32.totalorder %s152, %s153
      %p165 = scmp.eq.s32.totalorder %s24, 1
      %p166 = por %p164, %p165
      %p168 = scmp.ne.s32.totalorder %s153, %s167
      %p169 = scmp.eq.s32.totalorder %s24, 0
      %p170 = por %p168, %p169
      %s172 = sadd.s32 %s171, 1
      %p175 = scmp.eq.s32.totalorder %s18, 1
      %p176 = scmp.ne.s32.totalorder %s171, %s173
      %p177 = scmp.eq.s32.totalorder %s18, 0
      %p178 = por %p176, %p177
      %p179 = scmp.ne.s32.totalorder %s171, %s173
      %p180 = scmp.eq.s32.totalorder %s23, 1
      %p181 = por %p179, %p180
      %p182 = scmp.ne.s32.totalorder %s173, %s174
      %p183 = scmp.eq.s32.totalorder %s23, 0
      %p184 = por %p182, %p183
      %p185 = scmp.ne.s32.totalorder %s173, %s174
      %p186 = scmp.eq.s32.totalorder %s24, 1
      %p187 = por %p185, %p186
      %p189 = scmp.ne.s32.totalorder %s174, %s188
      %p190 = scmp.eq.s32.totalorder %s24, 0
      %p191 = por %p189, %p190
      %s192 = ssub.s32 %s25, %s37
      %s193 = ssub.s32 %s26, %s33
      %s194 = sor.u32 %s192, %s193
      %p195 = scmp.eq.s32.totalorder %s194, 0
      %s197 = sadd.s32 %s196, 1
      %s198 = scalar_select %p195, %s196, %s197
      %p201 = pneg %p195
      %p202 = scmp.eq.s32.totalorder %s18, 1
      %p203 = por %p201, %p202
      %p204 = scmp.ne.s32.totalorder %s196, %s199
      %p205 = scmp.eq.s32.totalorder %s18, 0
      %p206 = por %p204, %p205
      %p207 = scmp.ne.s32.totalorder %s196, %s199
      %p208 = scmp.eq.s32.totalorder %s23, 1
      %p209 = por %p207, %p208
      %p210 = scmp.ne.s32.totalorder %s199, %s200
      %p211 = scmp.eq.s32.totalorder %s23, 0
      %p212 = por %p210, %p211
      %p213 = scmp.ne.s32.totalorder %s199, %s200
      %p214 = scmp.eq.s32.totalorder %s24, 1
      %p215 = por %p213, %p214
      %p217 = scmp.ne.s32.totalorder %s200, %s216
      %p218 = scmp.eq.s32.totalorder %s24, 0
      %p219 = por %p217, %p218
      %s220 = ssub.s32 %s25, %s37
      %p221 = scmp.eq.s32.totalorder %s220, 0
      %s223 = sadd.s32 %s222, 1
      %s224 = scalar_select %p221, %s222, %s223
      %p227 = pneg %p221
      %p228 = scmp.eq.s32.totalorder %s18, 1
      %p229 = por %p227, %p228
      %p230 = scmp.ne.s32.totalorder %s222, %s225
      %p231 = scmp.eq.s32.totalorder %s18, 0
      %p232 = por %p230, %p231
      %p233 = scmp.ne.s32.totalorder %s222, %s225
      %p234 = scmp.eq.s32.totalorder %s23, 1
      %p235 = por %p233, %p234
      %p236 = scmp.ne.s32.totalorder %s225, %s226
      %p237 = scmp.eq.s32.totalorder %s23, 0
      %p238 = por %p236, %p237
      %p239 = scmp.ne.s32.totalorder %s225, %s226
      %p240 = scmp.eq.s32.totalorder %s24, 1
      %p241 = por %p239, %p240
      %p243 = scmp.ne.s32.totalorder %s226, %s242
      %p244 = scmp.eq.s32.totalorder %s24, 0
      %p245 = por %p243, %p244
      %p246 = scmp.le.s32.totalorder 1, %s18
      %p247 = scmp.lt.s32.totalorder %s18, 3
      %p248 = pnand %p246, %p247
      %p249 = pneg %p248
      // Predicated region
      $region9: #{tpu_custom_call.1} parent=5 // pred_check
        _
      $region10: #{tpu_custom_call.1} parent=5 // pred_check_branch
        %251 = sbr.rel (%p248) target = $region12
      $region11: #{tpu_custom_call.1} parent=5 // pred_region
        %s252 = ssub.s32 %s18, 1
        // Predicated region
        $region13: #{tpu_custom_call.1} parent=11 // pred_check
          %p253 = pneg %p79
        $region14: #{tpu_custom_call.1} parent=11 // pred_check_branch
          %255 = sbr.rel (%p253) target = $region16
        $region15: #{tpu_custom_call.1} parent=11 // pred_region
          _
        $region16: #{tpu_custom_call.1} parent=11 // pred_fallthru
          _
        // Predicated region
        $region17: #{tpu_custom_call.1} parent=11 // pred_check
          %p256 = pneg %p100
        $region18: #{tpu_custom_call.1} parent=11 // pred_check_branch
          %258 = sbr.rel (%p256) target = $region20
        $region19: #{tpu_custom_call.1} parent=11 // pred_region
          _
        $region20: #{tpu_custom_call.1} parent=11 // pred_fallthru
          _
        // Predicated region
        $region21: #{tpu_custom_call.1} parent=11 // pred_check
          %p259 = pneg %p121
        $region22: #{tpu_custom_call.1} parent=11 // pred_check_branch
          %261 = sbr.rel (%p259) target = $region24
        $region23: #{tpu_custom_call.1} parent=11 // pred_region
          _
        $region24: #{tpu_custom_call.1} parent=11 // pred_fallthru
          _
        // Predicated region
        $region25: #{tpu_custom_call.1} parent=11 // pred_check
          %p262 = pneg %p142
        $region26: #{tpu_custom_call.1} parent=11 // pred_check_branch
          %264 = sbr.rel (%p262) target = $region28
        $region27: #{tpu_custom_call.1} parent=11 // pred_region
          _
        $region28: #{tpu_custom_call.1} parent=11 // pred_fallthru
          _
        // Predicated region
        $region29: #{tpu_custom_call.1} parent=11 // pred_check
          %p265 = pneg %p163
        $region30: #{tpu_custom_call.1} parent=11 // pred_check_branch
          %267 = sbr.rel (%p265) target = $region32
        $region31: #{tpu_custom_call.1} parent=11 // pred_region
          _
        $region32: #{tpu_custom_call.1} parent=11 // pred_fallthru
          _
        // Predicated region
        $region33: #{tpu_custom_call.1} parent=11 // pred_check
          %p268 = pneg %p184
        $region34: #{tpu_custom_call.1} parent=11 // pred_check_branch
          %270 = sbr.rel (%p268) target = $region36
        $region35: #{tpu_custom_call.1} parent=11 // pred_region
          _
        $region36: #{tpu_custom_call.1} parent=11 // pred_fallthru
          _
      $region12: #{tpu_custom_call.1} parent=5 // pred_fallthru
        _
      %p271 = scmp.lt.s32.totalorder %s18, 2
      // Predicated region
      $region37: #{tpu_custom_call.1} parent=5 // pred_check
        %p272 = pneg %p271
      $region38: #{tpu_custom_call.1} parent=5 // pred_check_branch
        %274 = sbr.rel (%p272) target = $region40
      $region39: #{tpu_custom_call.1} parent=5 // pred_region
        // Predicated region
        $region41: #{tpu_custom_call.1} parent=39 // pred_check
          %p275 = pneg %p52
        $region42: #{tpu_custom_call.1} parent=39 // pred_check_branch
          %277 = sbr.rel (%p275) target = $region44
        $region43: #{tpu_custom_call.1} parent=39 // pred_region
          %s278 = smul.u32 32, %s26
          %p279 = scmp.lt.s32.totalorder %s25, 1
          %s280 = scalar_select %p279, %s25, 1
          %p281 = scmp.lt.s32.totalorder %s278, 31
          %s282 = scalar_select %p281, %s278, 31
          %s283 = smul.addr %s280, 32
          %s284 = sadd.s32 %s282, %s283
          %s285 = smul.addr %s284, 4
          %s286 = scalar_lea.vmem %s0, %s285
          %s287 = smul.u32 32, %s26
        $region44: #{tpu_custom_call.1} parent=39 // pred_fallthru
          _
      $region40: #{tpu_custom_call.1} parent=5 // pred_fallthru
        _
      %p288 = scmp.le.s32.totalorder 1, %s18
      %p289 = scmp.lt.s32.totalorder %s18, 3
      %p290 = pnand %p288, %p289
      %p291 = pneg %p290
      // Predicated region
      $region45: #{tpu_custom_call.1} parent=5 // pred_check
        _
      $region46: #{tpu_custom_call.1} parent=5 // pred_check_branch
        %293 = sbr.rel (%p290) target = $region48
      $region47: #{tpu_custom_call.1} parent=5 // pred_region
        %s294 = ssub.s32 %s18, 1
        %s295 = smul.u32 32, %s28
        %p296 = scmp.lt.s32.totalorder %s27, 1
        %s297 = scalar_select %p296, %s27, 1
        %p298 = scmp.lt.s32.totalorder %s295, 31
        %s299 = scalar_select %p298, %s295, 31
        %s300 = smul.addr %s297, 32
        %s301 = sadd.s32 %s299, %s300
        %s302 = smul.addr %s301, 4
        %s303 = scalar_lea.vmem %s0, %s302
        %p304 = pneg %p58
        %p305 = pneg %p55
        %p306 = pneg %p79
        %p307 = pneg %p76
        %p308 = pneg %p100
        %p309 = pneg %p97
        %p310 = pneg %p121
        %p311 = pneg %p118
        %p312 = pneg %p142
        %p313 = pneg %p139
        %p314 = pneg %p163
        %p315 = pneg %p160
        %p316 = pneg %p184
        %p317 = pneg %p181
        %p318 = pneg %p212
        %p319 = pneg %p209
        %s320 = smul.u32 32, %s28
        %p321 = scmp.lt.s32.totalorder %s27, 1
        %s322 = scalar_select %p321, %s27, 1
        %p323 = scmp.lt.s32.totalorder %s320, 31
        %s324 = scalar_select %p323, %s320, 31
        %s325 = smul.addr %s322, 32
        %s326 = sadd.s32 %s324, %s325
        %s327 = smul.addr %s326, 4
        %s328 = scalar_lea.vmem %s7, %s327
        %p329 = pneg %p238
        %p330 = pneg %p235
        %s331 = sand.u32 %s225, 1
        %s332 = scalar_lea.sflag [#allocation4], %s331
        %s333 = sand.u32 %s225, 1
        %s334 = scalar_lea.vmem [#allocation3], %s333
        %s335 = smul.u32 32, %s28
        %p336 = scmp.lt.s32.totalorder %s27, 1
        %s337 = scalar_select %p336, %s27, 1
        %p338 = scmp.lt.s32.totalorder %s335, 31
        %s339 = scalar_select %p338, %s335, 31
        %s340 = smul.addr %s337, 32
        %s341 = sadd.s32 %s339, %s340
        %s342 = smul.addr %s341, 4
        %s343 = scalar_lea.vmem %s0, %s342
        %s344 = smul.u32 32, %s28
        %s345 = smul.u32 32, %s28
        %p346 = scmp.lt.s32.totalorder %s27, 1
        %s347 = scalar_select %p346, %s27, 1
        %p348 = scmp.lt.s32.totalorder %s345, 31
        %s349 = scalar_select %p348, %s345, 31
        %s350 = smul.addr %s347, 32
        %s351 = sadd.s32 %s349, %s350
        %s352 = smul.addr %s351, 4
        %s353 = scalar_lea.vmem %s7, %s352
        %s354 = smul.u32 32, %s28
        %p356 = scmp.eq.s32.totalorder %s28, 0
        // Predicated region
        $region49: #{tpu_custom_call.1} parent=47 // pred_check
          %p357 = pneg %p356
        $region50: #{tpu_custom_call.1} parent=47 // pred_check_branch
          %359 = sbr.rel (%p357) target = $region52
        $region51: #{tpu_custom_call.1} parent=47 // pred_region
          %vm360 = vcmask 24576
          %361 = vst.msk [vmem:[#allocation2] sm:$0x1] %vm360, 0.0
        $region52: #{tpu_custom_call.1} parent=47 // pred_fallthru
          _
        %v362 = vld [vmem:[%s343] sm:$0xf]
        %v363 = vld [vmem:[%s343 + $0x4] sm:$0xf]
        %v364 = vld [vmem:[%s343 + $0x8] sm:$0xf]
        %v365 = vld [vmem:[%s343 + $0xc] sm:$0xf]
        %v366 = vld [vmem:[%s343 + $0x10] sm:$0xf]
        %v367 = vld [vmem:[%s343 + $0x14] sm:$0xf]
        %v368 = vld [vmem:[%s343 + $0x18] sm:$0xf]
        %v369 = vld [vmem:[%s343 + $0x1c] sm:$0xf]
        %v370 = vld [vmem:[%s343 + $0x20] sm:$0xf]
        %v371 = vld [vmem:[%s343 + $0x24] sm:$0xf]
        %v372 = vld [vmem:[%s343 + $0x28] sm:$0xf]
        %v373 = vld [vmem:[%s343 + $0x2c] sm:$0xf]
        %v374 = vld [vmem:[%s343 + $0x30] sm:$0xf]
        %v375 = vld [vmem:[%s343 + $0x34] sm:$0xf]
        %v376 = vld [vmem:[%s343 + $0x38] sm:$0xf]
        %v377 = vld [vmem:[%s343 + $0x3c] sm:$0xf]
        %v378 = vld [vmem:[%s343 + $0x40] sm:$0xf]
        %v379 = vld [vmem:[%s343 + $0x44] sm:$0xf]
        %v380 = vld [vmem:[%s343 + $0x48] sm:$0xf]
        %v381 = vld [vmem:[%s343 + $0x4c] sm:$0xf]
        %v382 = vld [vmem:[%s343 + $0x50] sm:$0xf]
        %v383 = vld [vmem:[%s343 + $0x54] sm:$0xf]
        %v384 = vld [vmem:[%s343 + $0x58] sm:$0xf]
        %v385 = vld [vmem:[%s343 + $0x5c] sm:$0xf]
        %v386 = vld [vmem:[%s343 + $0x60] sm:$0xf]
        %v387 = vld [vmem:[%s343 + $0x64] sm:$0xf]
        %v388 = vld [vmem:[%s343 + $0x68] sm:$0xf]
        %v389 = vld [vmem:[%s343 + $0x6c] sm:$0xf]
        %v390 = vld [vmem:[%s343 + $0x70] sm:$0xf]
        %v391 = vld [vmem:[%s343 + $0x74] sm:$0xf]
        %v392 = vld [vmem:[%s343 + $0x78] sm:$0xf]
        %v393 = vld [vmem:[%s343 + $0x7c] sm:$0xf]
        %v394 = vld [vmem:[%s1] sm:$0x3]
        %v395 = vld [vmem:[%s2] sm:$0x1]
        %v397 = vlaneseq
        %v398 = vshrl.u32 %v397, 7
        %v399 = vsub.s32 0, %v398
        %v400 = vrot.slane %v395, %v399
        %v434 = vunpack.c.l.b16 %v362
        %v435 = vunpack.c.l.b16 %v363
        %v436 = vunpack.c.l.b16 %v364
        %v437 = vunpack.c.l.b16 %v365
        %v438 = vunpack.c.l.b16 %v366
        %v439 = vunpack.c.l.b16 %v367
        %v440 = vunpack.c.l.b16 %v368
        %v441 = vunpack.c.l.b16 %v369
        %v442 = vunpack.c.l.b16 %v370
        %v443 = vunpack.c.l.b16 %v371
        %v444 = vunpack.c.l.b16 %v372
        %v445 = vunpack.c.l.b16 %v373
        %v446 = vunpack.c.l.b16 %v374
        %v447 = vunpack.c.l.b16 %v375
        %v448 = vunpack.c.l.b16 %v376
        %v449 = vunpack.c.l.b16 %v377
        %v450 = vunpack.c.l.b16 %v378
        %v451 = vunpack.c.l.b16 %v379
        %v452 = vunpack.c.l.b16 %v380
        %v453 = vunpack.c.l.b16 %v381
        %v454 = vunpack.c.l.b16 %v382
        %v455 = vunpack.c.l.b16 %v383
        %v456 = vunpack.c.l.b16 %v384
        %v457 = vunpack.c.l.b16 %v385
        %v458 = vunpack.c.l.b16 %v386
        %v459 = vunpack.c.l.b16 %v387
        %v460 = vunpack.c.l.b16 %v388
        %v461 = vunpack.c.l.b16 %v389
        %v462 = vunpack.c.l.b16 %v390
        %v463 = vunpack.c.l.b16 %v391
        %v464 = vunpack.c.l.b16 %v392
        %v465 = vunpack.c.l.b16 %v393
        %v466 = vpack.c.b16 %v435, %v434
        %v467 = vpack.c.b16 %v437, %v436
        %v468 = vpack.c.b16 %v439, %v438
        %v469 = vpack.c.b16 %v441, %v440
        %v470 = vpack.c.b16 %v443, %v442
        %v471 = vpack.c.b16 %v445, %v444
        %v472 = vpack.c.b16 %v447, %v446
        %v473 = vpack.c.b16 %v449, %v448
        %v474 = vpack.c.b16 %v451, %v450
        %v475 = vpack.c.b16 %v453, %v452
        %v476 = vpack.c.b16 %v455, %v454
        %v477 = vpack.c.b16 %v457, %v456
        %v478 = vpack.c.b16 %v459, %v458
        %v479 = vpack.c.b16 %v461, %v460
        %v480 = vpack.c.b16 %v463, %v462
        %v481 = vpack.c.b16 %v465, %v464
        %vm482 = vcmask 31744
        %v484 = vsel %vm482, %v466, 0
        %v487 = vsel %vm482, %v467, 0
        %v490 = vsel %vm482, %v468, 0
        %v493 = vsel %vm482, %v469, 0
        %v496 = vsel %vm482, %v470, 0
        %v499 = vsel %vm482, %v471, 0
        %v502 = vsel %vm482, %v472, 0
        %v505 = vsel %vm482, %v473, 0
        %v508 = vsel %vm482, %v474, 0
        %v511 = vsel %vm482, %v475, 0
        %v514 = vsel %vm482, %v476, 0
        %v517 = vsel %vm482, %v477, 0
        %v520 = vsel %vm482, %v478, 0
        %v523 = vsel %vm482, %v479, 0
        %v526 = vsel %vm482, %v480, 0
        %v529 = vsel %vm482, %v481, 0
        %vm531 = vcmask 1041408
        %v533 = vsel %vm531, %v394, 0
        %535 = vmatprep.subr.bf16.mxu0 0
        %536 = vmatpush1.bf16.msra.mxu0 0
        %537 = vmatprep.subr.bf16.mxu0 0
        %538 = vmatpush1.bf16.msra.mxu0 0
        %539 = vmatprep.subr.bf16.mxu0 0
        %540 = vmatpush1.bf16.msra.mxu0 0
        %541 = vmatprep.subr.bf16.mxu0 0
        %542 = vmatpush1.bf16.msra.mxu0 0
        %543 = vmatprep.subr.bf16.mxu0 0
        %544 = vmatpush1.bf16.msra.mxu0 0
        %545 = vmatprep.subr.bf16.mxu0 0
        %546 = vmatpush1.bf16.msra.mxu0 0
        %547 = vmatprep.subr.bf16.mxu0 0
        %548 = vmatpush1.bf16.msra.mxu0 0
        %549 = vmatprep.subr.bf16.mxu0 0
        %550 = vmatpush1.bf16.msra.mxu0 %v533
        %551 = vmatprep.subr.bf16.mxu0 0
        %552 = vmatpush2.bf16.msra.mxu0 0
        %553 = vmatprep.subr.bf16.mxu0 0
        %554 = vmatpush2.bf16.msra.mxu0 0
        %555 = vmatprep.subr.bf16.mxu0 0
        %556 = vmatpush2.bf16.msra.mxu0 0
        %557 = vmatprep.subr.bf16.mxu0 0
        %558 = vmatpush2.bf16.msra.mxu0 0
        %559 = vmatprep.subr.bf16.mxu0 0
        %560 = vmatpush2.bf16.msra.mxu0 0
        %561 = vmatprep.subr.bf16.mxu0 0
        %562 = vmatpush2.bf16.msra.mxu0 0
        %563 = vmatprep.subr.bf16.mxu0 0
        %564 = vmatpush2.bf16.msra.mxu0 0
        %565 = vmatprep.subr.bf16.mxu0 0
        %566 = vmatpush2.bf16.msra.mxu0 0
        %567 = vmatprep.mubr.bf16.mxu0 0
        %568 = vmatmul.mubr.bf16.gmra.mxu0 %v484
        %v569 = vpop.f32.mrf.mxu0
        %v570 = vadd.f32 %v400, %v569
        %v571 = vpop.f32.mrf.mxu0
        %v572 = vpop.f32.mrf.mxu0
        %v573 = vadd.f32 %v400, %v572
        %v574 = vpop.f32.mrf.mxu0
        %575 = vmatprep.mubr.bf16.mxu0 0
        %576 = vmatmul.mubr.bf16.gmra.mxu0 %v487
        %v577 = vpop.f32.mrf.mxu0
        %v578 = vadd.f32 %v400, %v577
        %v579 = vpop.f32.mrf.mxu0
        %v580 = vpop.f32.mrf.mxu0
        %v581 = vadd.f32 %v400, %v580
        %v582 = vpop.f32.mrf.mxu0
        %583 = vmatprep.mubr.bf16.mxu0 0
        %584 = vmatmul.mubr.bf16.gmra.mxu0 %v490
        %v585 = vpop.f32.mrf.mxu0
        %v586 = vadd.f32 %v400, %v585
        %v587 = vpop.f32.mrf.mxu0
        %v588 = vpop.f32.mrf.mxu0
        %v589 = vadd.f32 %v400, %v588
        %v590 = vpop.f32.mrf.mxu0
        %591 = vmatprep.mubr.bf16.mxu0 0
        %592 = vmatmul.mubr.bf16.gmra.mxu0 %v493
        %v593 = vpop.f32.mrf.mxu0
        %v594 = vadd.f32 %v400, %v593
        %v595 = vpop.f32.mrf.mxu0
        %v596 = vpop.f32.mrf.mxu0
        %v597 = vadd.f32 %v400, %v596
        %v598 = vpop.f32.mrf.mxu0
        %599 = vmatprep.mubr.bf16.mxu0 0
        %600 = vmatmul.mubr.bf16.gmra.mxu0 %v496
        %v601 = vpop.f32.mrf.mxu0
        %v602 = vadd.f32 %v400, %v601
        %v603 = vpop.f32.mrf.mxu0
        %v604 = vpop.f32.mrf.mxu0
        %v605 = vadd.f32 %v400, %v604
        %v606 = vpop.f32.mrf.mxu0
        %607 = vmatprep.mubr.bf16.mxu0 0
        %608 = vmatmul.mubr.bf16.gmra.mxu0 %v499
        %v609 = vpop.f32.mrf.mxu0
        %v610 = vadd.f32 %v400, %v609
        %v611 = vpop.f32.mrf.mxu0
        %v612 = vpop.f32.mrf.mxu0
        %v613 = vadd.f32 %v400, %v612
        %v614 = vpop.f32.mrf.mxu0
        %615 = vmatprep.mubr.bf16.mxu0 0
        %616 = vmatmul.mubr.bf16.gmra.mxu0 %v502
        %v617 = vpop.f32.mrf.mxu0
        %v618 = vadd.f32 %v400, %v617
        %v619 = vpop.f32.mrf.mxu0
        %v620 = vpop.f32.mrf.mxu0
        %v621 = vadd.f32 %v400, %v620
        %v622 = vpop.f32.mrf.mxu0
        %623 = vmatprep.mubr.bf16.mxu0 0
        %624 = vmatmul.mubr.bf16.gmra.mxu0 %v505
        %v625 = vpop.f32.mrf.mxu0
        %v626 = vadd.f32 %v400, %v625
        %v627 = vpop.f32.mrf.mxu0
        %v628 = vpop.f32.mrf.mxu0
        %v629 = vadd.f32 %v400, %v628
        %v630 = vpop.f32.mrf.mxu0
        %631 = vmatprep.mubr.bf16.mxu0 0
        %632 = vmatmul.mubr.bf16.gmra.mxu0 %v508
        %v633 = vpop.f32.mrf.mxu0
        %v634 = vadd.f32 %v400, %v633
        %v635 = vpop.f32.mrf.mxu0
        %v636 = vpop.f32.mrf.mxu0
        %v637 = vadd.f32 %v400, %v636
        %v638 = vpop.f32.mrf.mxu0
        %639 = vmatprep.mubr.bf16.mxu0 0
        %640 = vmatmul.mubr.bf16.gmra.mxu0 %v511
        %v641 = vpop.f32.mrf.mxu0
        %v642 = vadd.f32 %v400, %v641
        %v643 = vpop.f32.mrf.mxu0
        %v644 = vpop.f32.mrf.mxu0
        %v645 = vadd.f32 %v400, %v644
        %v646 = vpop.f32.mrf.mxu0
        %647 = vmatprep.mubr.bf16.mxu0 0
        %648 = vmatmul.mubr.bf16.gmra.mxu0 %v514
        %v649 = vpop.f32.mrf.mxu0
        %v650 = vadd.f32 %v400, %v649
        %v651 = vpop.f32.mrf.mxu0
        %v652 = vpop.f32.mrf.mxu0
        %v653 = vadd.f32 %v400, %v652
        %v654 = vpop.f32.mrf.mxu0
        %655 = vmatprep.mubr.bf16.mxu0 0
        %656 = vmatmul.mubr.bf16.gmra.mxu0 %v517
        %v657 = vpop.f32.mrf.mxu0
        %v658 = vadd.f32 %v400, %v657
        %v659 = vpop.f32.mrf.mxu0
        %v660 = vpop.f32.mrf.mxu0
        %v661 = vadd.f32 %v400, %v660
        %v662 = vpop.f32.mrf.mxu0
        %663 = vmatprep.mubr.bf16.mxu0 0
        %664 = vmatmul.mubr.bf16.gmra.mxu0 %v520
        %v665 = vpop.f32.mrf.mxu0
        %v666 = vadd.f32 %v400, %v665
        %v667 = vpop.f32.mrf.mxu0
        %v668 = vpop.f32.mrf.mxu0
        %v669 = vadd.f32 %v400, %v668
        %v670 = vpop.f32.mrf.mxu0
        %671 = vmatprep.mubr.bf16.mxu0 0
        %672 = vmatmul.mubr.bf16.gmra.mxu0 %v523
        %v673 = vpop.f32.mrf.mxu0
        %v674 = vadd.f32 %v400, %v673
        %v675 = vpop.f32.mrf.mxu0
        %v676 = vpop.f32.mrf.mxu0
        %v677 = vadd.f32 %v400, %v676
        %v678 = vpop.f32.mrf.mxu0
        %679 = vmatprep.mubr.bf16.mxu0 0
        %680 = vmatmul.mubr.bf16.gmra.mxu0 %v526
        %v681 = vpop.f32.mrf.mxu0
        %v682 = vadd.f32 %v400, %v681
        %v683 = vpop.f32.mrf.mxu0
        %v684 = vpop.f32.mrf.mxu0
        %v685 = vadd.f32 %v400, %v684
        %v686 = vpop.f32.mrf.mxu0
        %687 = vmatprep.mubr.bf16.mxu0 0
        %688 = vmatmul.mubr.bf16.gmra.mxu0 %v529
        %v689 = vpop.f32.mrf.mxu0
        %v690 = vadd.f32 %v400, %v689
        %v691 = vpop.f32.mrf.mxu0
        %v692 = vpop.f32.mrf.mxu0
        %v693 = vadd.f32 %v400, %v692
        %v694 = vpop.f32.mrf.mxu0
        %695 = vdwg.mxu0
        %v696 = vmax.f32 %v570, 0.0
        %v697 = vmax.f32 %v573, 0.0
        %v698 = vmax.f32 %v578, 0.0
        %v699 = vmax.f32 %v581, 0.0
        %v700 = vmax.f32 %v586, 0.0
        %v701 = vmax.f32 %v589, 0.0
        %v702 = vmax.f32 %v594, 0.0
        %v703 = vmax.f32 %v597, 0.0
        %v704 = vmax.f32 %v602, 0.0
        %v705 = vmax.f32 %v605, 0.0
        %v706 = vmax.f32 %v610, 0.0
        %v707 = vmax.f32 %v613, 0.0
        %v708 = vmax.f32 %v618, 0.0
        %v709 = vmax.f32 %v621, 0.0
        %v710 = vmax.f32 %v626, 0.0
        %v711 = vmax.f32 %v629, 0.0
        %v712 = vmax.f32 %v634, 0.0
        %v713 = vmax.f32 %v637, 0.0
        %v714 = vmax.f32 %v642, 0.0
        %v715 = vmax.f32 %v645, 0.0
        %v716 = vmax.f32 %v650, 0.0
        %v717 = vmax.f32 %v653, 0.0
        %v718 = vmax.f32 %v658, 0.0
        %v719 = vmax.f32 %v661, 0.0
        %v720 = vmax.f32 %v666, 0.0
        %v721 = vmax.f32 %v669, 0.0
        %v722 = vmax.f32 %v674, 0.0
        %v723 = vmax.f32 %v677, 0.0
        %v724 = vmax.f32 %v682, 0.0
        %v725 = vmax.f32 %v685, 0.0
        %v726 = vmax.f32 %v690, 0.0
        %v727 = vmax.f32 %v693, 0.0
        %v728 = vpack.c.bf16 %v697, %v696
        %v729 = vpack.c.bf16 %v699, %v698
        %v730 = vpack.c.bf16 %v701, %v700
        %v731 = vpack.c.bf16 %v703, %v702
        %v732 = vpack.c.bf16 %v705, %v704
        %v733 = vpack.c.bf16 %v707, %v706
        %v734 = vpack.c.bf16 %v709, %v708
        %v735 = vpack.c.bf16 %v711, %v710
        %v736 = vpack.c.bf16 %v713, %v712
        %v737 = vpack.c.bf16 %v715, %v714
        %v738 = vpack.c.bf16 %v717, %v716
        %v739 = vpack.c.bf16 %v719, %v718
        %v740 = vpack.c.bf16 %v721, %v720
        %v741 = vpack.c.bf16 %v723, %v722
        %v742 = vpack.c.bf16 %v725, %v724
        %v743 = vpack.c.bf16 %v727, %v726
        %v760 = vunpack.c.l.b16 %v728
        %v761 = vunpack.c.h.b16 %v728
        %v762 = vunpack.c.l.b16 %v729
        %v763 = vunpack.c.h.b16 %v729
        %v764 = vunpack.c.l.b16 %v730
        %v765 = vunpack.c.h.b16 %v730
        %v766 = vunpack.c.l.b16 %v731
        %v767 = vunpack.c.h.b16 %v731
        %v768 = vunpack.c.l.b16 %v732
        %v769 = vunpack.c.h.b16 %v732
        %v770 = vunpack.c.l.b16 %v733
        %v771 = vunpack.c.h.b16 %v733
        %v772 = vunpack.c.l.b16 %v734
        %v773 = vunpack.c.h.b16 %v734
        %v774 = vunpack.c.l.b16 %v735
        %v775 = vunpack.c.h.b16 %v735
        %v776 = vunpack.c.l.b16 %v736
        %v777 = vunpack.c.h.b16 %v736
        %v778 = vunpack.c.l.b16 %v737
        %v779 = vunpack.c.h.b16 %v737
        %v780 = vunpack.c.l.b16 %v738
        %v781 = vunpack.c.h.b16 %v738
        %v782 = vunpack.c.l.b16 %v739
        %v783 = vunpack.c.h.b16 %v739
        %v784 = vunpack.c.l.b16 %v740
        %v785 = vunpack.c.h.b16 %v740
        %v786 = vunpack.c.l.b16 %v741
        %v787 = vunpack.c.h.b16 %v741
        %v788 = vunpack.c.l.b16 %v742
        %v789 = vunpack.c.h.b16 %v742
        %v790 = vunpack.c.l.b16 %v743
        %v791 = vunpack.c.h.b16 %v743
        %v792 = vpack.c.b16 %v760, %v760
        %v793 = vpack.c.b16 %v761, %v761
        %v794 = vpack.c.b16 %v762, %v762
        %v795 = vpack.c.b16 %v763, %v763
        %v796 = vpack.c.b16 %v764, %v764
        %v797 = vpack.c.b16 %v765, %v765
        %v798 = vpack.c.b16 %v766, %v766
        %v799 = vpack.c.b16 %v767, %v767
        %v800 = vpack.c.b16 %v768, %v768
        %v801 = vpack.c.b16 %v769, %v769
        %v802 = vpack.c.b16 %v770, %v770
        %v803 = vpack.c.b16 %v771, %v771
        %v804 = vpack.c.b16 %v772, %v772
        %v805 = vpack.c.b16 %v773, %v773
        %v806 = vpack.c.b16 %v774, %v774
        %v807 = vpack.c.b16 %v775, %v775
        %v808 = vpack.c.b16 %v776, %v776
        %v809 = vpack.c.b16 %v777, %v777
        %v810 = vpack.c.b16 %v778, %v778
        %v811 = vpack.c.b16 %v779, %v779
        %v812 = vpack.c.b16 %v780, %v780
        %v813 = vpack.c.b16 %v781, %v781
        %v814 = vpack.c.b16 %v782, %v782
        %v815 = vpack.c.b16 %v783, %v783
        %v816 = vpack.c.b16 %v784, %v784
        %v817 = vpack.c.b16 %v785, %v785
        %v818 = vpack.c.b16 %v786, %v786
        %v819 = vpack.c.b16 %v787, %v787
        %v820 = vpack.c.b16 %v788, %v788
        %v821 = vpack.c.b16 %v789, %v789
        %v822 = vpack.c.b16 %v790, %v790
        %v823 = vpack.c.b16 %v791, %v791
        %vm856 = vcmask 60416
        %857 = vst.msk [vmem:[%s353] sm:$0xf] %vm856, %v792
        %858 = vst.msk [vmem:[%s353 + $0x4] sm:$0xf] %vm856, %v793
        %859 = vst.msk [vmem:[%s353 + $0x8] sm:$0xf] %vm856, %v794
        %860 = vst.msk [vmem:[%s353 + $0xc] sm:$0xf] %vm856, %v795
        %861 = vst.msk [vmem:[%s353 + $0x10] sm:$0xf] %vm856, %v796
        %862 = vst.msk [vmem:[%s353 + $0x14] sm:$0xf] %vm856, %v797
        %863 = vst.msk [vmem:[%s353 + $0x18] sm:$0xf] %vm856, %v798
        %864 = vst.msk [vmem:[%s353 + $0x1c] sm:$0xf] %vm856, %v799
        %865 = vst.msk [vmem:[%s353 + $0x20] sm:$0xf] %vm856, %v800
        %866 = vst.msk [vmem:[%s353 + $0x24] sm:$0xf] %vm856, %v801
        %867 = vst.msk [vmem:[%s353 + $0x28] sm:$0xf] %vm856, %v802
        %868 = vst.msk [vmem:[%s353 + $0x2c] sm:$0xf] %vm856, %v803
        %869 = vst.msk [vmem:[%s353 + $0x30] sm:$0xf] %vm856, %v804
        %870 = vst.msk [vmem:[%s353 + $0x34] sm:$0xf] %vm856, %v805
        %871 = vst.msk [vmem:[%s353 + $0x38] sm:$0xf] %vm856, %v806
        %872 = vst.msk [vmem:[%s353 + $0x3c] sm:$0xf] %vm856, %v807
        %873 = vst.msk [vmem:[%s353 + $0x40] sm:$0xf] %vm856, %v808
        %874 = vst.msk [vmem:[%s353 + $0x44] sm:$0xf] %vm856, %v809
        %875 = vst.msk [vmem:[%s353 + $0x48] sm:$0xf] %vm856, %v810
        %876 = vst.msk [vmem:[%s353 + $0x4c] sm:$0xf] %vm856, %v811
        %877 = vst.msk [vmem:[%s353 + $0x50] sm:$0xf] %vm856, %v812
        %878 = vst.msk [vmem:[%s353 + $0x54] sm:$0xf] %vm856, %v813
        %879 = vst.msk [vmem:[%s353 + $0x58] sm:$0xf] %vm856, %v814
        %880 = vst.msk [vmem:[%s353 + $0x5c] sm:$0xf] %vm856, %v815
        %881 = vst.msk [vmem:[%s353 + $0x60] sm:$0xf] %vm856, %v816
        %882 = vst.msk [vmem:[%s353 + $0x64] sm:$0xf] %vm856, %v817
        %883 = vst.msk [vmem:[%s353 + $0x68] sm:$0xf] %vm856, %v818
        %884 = vst.msk [vmem:[%s353 + $0x6c] sm:$0xf] %vm856, %v819
        %885 = vst.msk [vmem:[%s353 + $0x70] sm:$0xf] %vm856, %v820
        %886 = vst.msk [vmem:[%s353 + $0x74] sm:$0xf] %vm856, %v821
        %887 = vst.msk [vmem:[%s353 + $0x78] sm:$0xf] %vm856, %v822
        %888 = vst.msk [vmem:[%s353 + $0x7c] sm:$0xf] %vm856, %v823
        %v889 = vunpack.c.l.bf16 %v362
        %v890 = vunpack.c.l.bf16 %v363
        %v891 = vunpack.c.l.bf16 %v364
        %v892 = vunpack.c.l.bf16 %v365
        %v893 = vunpack.c.l.bf16 %v366
        %v894 = vunpack.c.l.bf16 %v367
        %v895 = vunpack.c.l.bf16 %v368
        %v896 = vunpack.c.l.bf16 %v369
        %v897 = vunpack.c.l.bf16 %v370
        %v898 = vunpack.c.l.bf16 %v371
        %v899 = vunpack.c.l.bf16 %v372
        %v900 = vunpack.c.l.bf16 %v373
        %v901 = vunpack.c.l.bf16 %v374
        %v902 = vunpack.c.l.bf16 %v375
        %v903 = vunpack.c.l.bf16 %v376
        %v904 = vunpack.c.l.bf16 %v377
        %v905 = vunpack.c.l.bf16 %v378
        %v906 = vunpack.c.l.bf16 %v379
        %v907 = vunpack.c.l.bf16 %v380
        %v908 = vunpack.c.l.bf16 %v381
        %v909 = vunpack.c.l.bf16 %v382
        %v910 = vunpack.c.l.bf16 %v383
        %v911 = vunpack.c.l.bf16 %v384
        %v912 = vunpack.c.l.bf16 %v385
        %v913 = vunpack.c.l.bf16 %v386
        %v914 = vunpack.c.l.bf16 %v387
        %v915 = vunpack.c.l.bf16 %v388
        %v916 = vunpack.c.l.bf16 %v389
        %v917 = vunpack.c.l.bf16 %v390
        %v918 = vunpack.c.l.bf16 %v391
        %v919 = vunpack.c.l.bf16 %v392
        %v920 = vunpack.c.l.bf16 %v393
        %v921 = vld [vmem:[#allocation2] sm:$0x1]
        %v922 = vsel %vm482, %v889, 0.0
        %v923 = vsel %vm482, %v890, 0.0
        %v924 = vadd.f32 %v922, %v923
        %v925 = vsel %vm482, %v891, 0.0
        %v926 = vadd.f32 %v924, %v925
        %v927 = vsel %vm482, %v892, 0.0
        %v928 = vadd.f32 %v926, %v927
        %v929 = vsel %vm482, %v893, 0.0
        %v930 = vadd.f32 %v928, %v929
        %v931 = vsel %vm482, %v894, 0.0
        %v932 = vadd.f32 %v930, %v931
        %v933 = vsel %vm482, %v895, 0.0
        %v934 = vadd.f32 %v932, %v933
        %v935 = vsel %vm482, %v896, 0.0
        %v936 = vadd.f32 %v934, %v935
        %v937 = vsel %vm482, %v897, 0.0
        %v938 = vadd.f32 %v936, %v937
        %v939 = vsel %vm482, %v898, 0.0
        %v940 = vadd.f32 %v938, %v939
        %v941 = vsel %vm482, %v899, 0.0
        %v942 = vadd.f32 %v940, %v941
        %v943 = vsel %vm482, %v900, 0.0
        %v944 = vadd.f32 %v942, %v943
        %v945 = vsel %vm482, %v901, 0.0
        %v946 = vadd.f32 %v944, %v945
        %v947 = vsel %vm482, %v902, 0.0
        %v948 = vadd.f32 %v946, %v947
        %v949 = vsel %vm482, %v903, 0.0
        %v950 = vadd.f32 %v948, %v949
        %v951 = vsel %vm482, %v904, 0.0
        %v952 = vadd.f32 %v950, %v951
        %v953 = vsel %vm482, %v905, 0.0
        %v954 = vadd.f32 %v952, %v953
        %v955 = vsel %vm482, %v906, 0.0
        %v956 = vadd.f32 %v954, %v955
        %v957 = vsel %vm482, %v907, 0.0
        %v958 = vadd.f32 %v956, %v957
        %v959 = vsel %vm482, %v908, 0.0
        %v960 = vadd.f32 %v958, %v959
        %v961 = vsel %vm482, %v909, 0.0
        %v962 = vadd.f32 %v960, %v961
        %v963 = vsel %vm482, %v910, 0.0
        %v964 = vadd.f32 %v962, %v963
        %v965 = vsel %vm482, %v911, 0.0
        %v966 = vadd.f32 %v964, %v965
        %v967 = vsel %vm482, %v912, 0.0
        %v968 = vadd.f32 %v966, %v967
        %v969 = vsel %vm482, %v913, 0.0
        %v970 = vadd.f32 %v968, %v969
        %v971 = vsel %vm482, %v914, 0.0
        %v972 = vadd.f32 %v970, %v971
        %v973 = vsel %vm482, %v915, 0.0
        %v974 = vadd.f32 %v972, %v973
        %v975 = vsel %vm482, %v916, 0.0
        %v976 = vadd.f32 %v974, %v975
        %v977 = vsel %vm482, %v917, 0.0
        %v978 = vadd.f32 %v976, %v977
        %v979 = vsel %vm482, %v918, 0.0
        %v980 = vadd.f32 %v978, %v979
        %v981 = vsel %vm482, %v919, 0.0
        %v982 = vadd.f32 %v980, %v981
        %v983 = vsel %vm482, %v920, 0.0
        %v984 = vadd.f32 %v982, %v983
        %v985 = vrot.slane %v984, 4
        %v986 = vadd.f32 %v984, %v985
        %v987 = vrot.slane %v986, 2
        %v988 = vadd.f32 %v986, %v987
        %v989 = vrot.slane %v988, 1
        %v990 = vadd.f32 %v988, %v989
        %v991 = vadd.f32 %v921, %v990
        %vm992 = vcmask 24576
        %993 = vst.msk [vmem:[#allocation2] sm:$0x1] %vm992, %v991
        // Predicated region
        $region53: #{tpu_custom_call.1} parent=47 // pred_check
          %p994 = pneg %p356
        $region54: #{tpu_custom_call.1} parent=47 // pred_check_branch
          %996 = sbr.rel (%p994) target = $region56
        $region55: #{tpu_custom_call.1} parent=47 // pred_region
          %v997 = vld [vmem:[#allocation2] sm:$0x1]
          %v998 = vmul.f32 %v997, 0.00390625
          %v999 = vld [vmem:[%s3] sm:$0x3]
          %v1000 = vunpack.c.l.bf16 %v999
          %v1001 = vld [vmem:[%s4] sm:$0x1]
          %v1003 = vsel %vm482, %v998, 0
          %vm1005 = vcmask 1043456
          %v1007 = vsel %vm1005, %v1000, 0
          %1009 = vmatprep.subr.mxu0 0.0
          %1010 = vmatpush1.msra.mxu0 0.0
          %1011 = vmatprep.subr.mxu0 0.0
          %1012 = vmatpush1.msra.mxu0 0.0
          %1013 = vmatprep.subr.mxu0 0.0
          %1014 = vmatpush1.msra.mxu0 0.0
          %1015 = vmatprep.subr.mxu0 0.0
          %1016 = vmatpush1.msra.mxu0 0.0
          %1017 = vmatprep.subr.mxu0 0.0
          %1018 = vmatpush1.msra.mxu0 0.0
          %1019 = vmatprep.subr.mxu0 0.0
          %1020 = vmatpush1.msra.mxu0 0.0
          %1021 = vmatprep.subr.mxu0 0.0
          %1022 = vmatpush1.msra.mxu0 0.0
          %1023 = vmatprep.subr.mxu0 0.0
          %1024 = vmatpush1.msra.mxu0 0.0
          %1025 = vmatprep.subr.mxu0 0.0
          %1026 = vmatpush1.msra.mxu0 0.0
          %1027 = vmatprep.subr.mxu0 0.0
          %1028 = vmatpush1.msra.mxu0 0.0
          %1029 = vmatprep.subr.mxu0 0.0
          %1030 = vmatpush1.msra.mxu0 0.0
          %1031 = vmatprep.subr.mxu0 0.0
          %1032 = vmatpush1.msra.mxu0 0.0
          %1033 = vmatprep.subr.mxu0 0.0
          %1034 = vmatpush1.msra.mxu0 0.0
          %1035 = vmatprep.subr.mxu0 0.0
          %1036 = vmatpush1.msra.mxu0 0.0
          %1037 = vmatprep.subr.mxu0 0.0
          %1038 = vmatpush1.msra.mxu0 0.0
          %1039 = vmatprep.subr.mxu0 0.0
          %1040 = vmatpush1.msra.mxu0 %v1007
          %1041 = vmatprep.subr.mxu0 0.0
          %1042 = vmatpush2.msra.mxu0 0.0
          %1043 = vmatprep.subr.mxu0 0.0
          %1044 = vmatpush2.msra.mxu0 0.0
          %1045 = vmatprep.subr.mxu0 0.0
          %1046 = vmatpush2.msra.mxu0 0.0
          %1047 = vmatprep.subr.mxu0 0.0
          %1048 = vmatpush2.msra.mxu0 0.0
          %1049 = vmatprep.subr.mxu0 0.0
          %1050 = vmatpush2.msra.mxu0 0.0
          %1051 = vmatprep.subr.mxu0 0.0
          %1052 = vmatpush2.msra.mxu0 0.0
          %1053 = vmatprep.subr.mxu0 0.0
          %1054 = vmatpush2.msra.mxu0 0.0
          %1055 = vmatprep.subr.mxu0 0.0
          %1056 = vmatpush2.msra.mxu0 0.0
          %1057 = vmatprep.subr.mxu0 0.0
          %1058 = vmatpush2.msra.mxu0 0.0
          %1059 = vmatprep.subr.mxu0 0.0
          %1060 = vmatpush2.msra.mxu0 0.0
          %1061 = vmatprep.subr.mxu0 0.0
          %1062 = vmatpush2.msra.mxu0 0.0
          %1063 = vmatprep.subr.mxu0 0.0
          %1064 = vmatpush2.msra.mxu0 0.0
          %1065 = vmatprep.subr.mxu0 0.0
          %1066 = vmatpush2.msra.mxu0 0.0
          %1067 = vmatprep.subr.mxu0 0.0
          %1068 = vmatpush2.msra.mxu0 0.0
          %1069 = vmatprep.subr.mxu0 0.0
          %1070 = vmatpush2.msra.mxu0 0.0
          %1071 = vmatprep.subr.mxu0 0.0
          %1072 = vmatpush2.msra.mxu0 0.0
          %1073 = vmatprep.mubr.f32.mxu0 0.0
          %1074 = vmatmul.mubr.f32.gmra.mxu0 %v1003
          %v1075 = vpop.f32.mrf.mxu0
          %v1076 = vadd.f32 %v1001, %v1075
          %v1077 = vpop.f32.mrf.mxu0
          %1078 = vdwg.mxu0
          %v1079 = vmax.f32 %v1076, 0.0
          %v1080 = vpack.c.bf16 %v1079, %v1079
          %v1081 = vld [vmem:[%s5] sm:$0xf]
          %v1082 = vld [vmem:[%s6] sm:$0x1]
          %vm1083 = vcmask 64512
          %v1085 = vsel %vm1083, %v1080, 0
          %v1088 = vsel %vm1005, %v1081, 0
          %1090 = vmatprep.subr.bf16.mxu0 0
          %1091 = vmatpush1.bf16.msra.mxu0 0
          %1092 = vmatprep.subr.bf16.mxu0 0
          %1093 = vmatpush1.bf16.msra.mxu0 0
          %1094 = vmatprep.subr.bf16.mxu0 0
          %1095 = vmatpush1.bf16.msra.mxu0 0
          %1096 = vmatprep.subr.bf16.mxu0 0
          %1097 = vmatpush1.bf16.msra.mxu0 0
          %1098 = vmatprep.subr.bf16.mxu0 0
          %1099 = vmatpush1.bf16.msra.mxu0 0
          %1100 = vmatprep.subr.bf16.mxu0 0
          %1101 = vmatpush1.bf16.msra.mxu0 0
          %1102 = vmatprep.subr.bf16.mxu0 0
          %1103 = vmatpush1.bf16.msra.mxu0 0
          %1104 = vmatprep.subr.bf16.mxu0 0
          %1105 = vmatpush1.bf16.msra.mxu0 %v1088
          %1106 = vmatprep.subr.bf16.mxu0 0
          %1107 = vmatpush2.bf16.msra.mxu0 0
          %1108 = vmatprep.subr.bf16.mxu0 0
          %1109 = vmatpush2.bf16.msra.mxu0 0
          %1110 = vmatprep.subr.bf16.mxu0 0
          %1111 = vmatpush2.bf16.msra.mxu0 0
          %1112 = vmatprep.subr.bf16.mxu0 0
          %1113 = vmatpush2.bf16.msra.mxu0 0
          %1114 = vmatprep.subr.bf16.mxu0 0
          %1115 = vmatpush2.bf16.msra.mxu0 0
          %1116 = vmatprep.subr.bf16.mxu0 0
          %1117 = vmatpush2.bf16.msra.mxu0 0
          %1118 = vmatprep.subr.bf16.mxu0 0
          %1119 = vmatpush2.bf16.msra.mxu0 0
          %1120 = vmatprep.subr.bf16.mxu0 0
          %1121 = vmatpush2.bf16.msra.mxu0 0
          %1122 = vmatprep.mubr.bf16.mxu0 0
          %1123 = vmatmul.mubr.bf16.gmra.mxu0 %v1085
          %v1124 = vpop.f32.mrf.mxu0
          %v1125 = vadd.f32 %v1082, %v1124
          %v1126 = vpop.f32.mrf.mxu0
          %v1127 = vpop.f32.mrf.mxu0
          %v1128 = vpop.f32.mrf.mxu0
          %1129 = vdwg.mxu0
          %vm1130 = vcmask 57344
          %1131 = vst.msk [vmem:[%s334] sm:$0x1] %vm1130, %v1125
        $region56: #{tpu_custom_call.1} parent=47 // pred_fallthru
          _
        %s1132 = smul.u32 32, %s28
        %p1133 = scmp.lt.s32.totalorder %s27, 1
        %s1134 = scalar_select %p1133, %s27, 1
        %p1135 = scmp.lt.s32.totalorder %s1132, 31
        %s1136 = scalar_select %p1135, %s1132, 31
        %s1137 = smul.addr %s1134, 32
        %s1138 = sadd.s32 %s1136, %s1137
        %s1139 = smul.addr %s1138, 4
        %s1140 = scalar_lea.vmem %s7, %s1139
        %s1141 = sand.u32 %s225, 1
        %s1142 = scalar_lea.sflag [#allocation4], %s1141
        %s1143 = sand.u32 %s225, 1
        %s1144 = scalar_lea.vmem [#allocation3], %s1143
        // Predicated region
        $region57: #{tpu_custom_call.1} parent=47 // pred_check
          %p1145 = pneg %p209
        $region58: #{tpu_custom_call.1} parent=47 // pred_check_branch
          %1147 = sbr.rel (%p1145) target = $region60
        $region59: #{tpu_custom_call.1} parent=47 // pred_region
          %s1148 = smul.u32 32, %s28
        $region60: #{tpu_custom_call.1} parent=47 // pred_fallthru
          _
        // Predicated region
        $region61: #{tpu_custom_call.1} parent=47 // pred_check
          %p1149 = pneg %p235
        $region62: #{tpu_custom_call.1} parent=47 // pred_check_branch
          %1151 = sbr.rel (%p1149) target = $region64
        $region63: #{tpu_custom_call.1} parent=47 // pred_region
          %s1153 = ssub.s32 16, 16
          %1154 = vsyncadd %s1142, %s1153
          %s1155 = smul.addr %s27, 16
          %s1156 = scalar_lea.hbm %s8, %s1155
          %s1158 = sshll.u32 %s1144, 4
          %s1159 = int_to_ptr.vmem [resolvable:$true] %s1158
          %1161 = dma.vmem_to_hbm [thread:$0]  %s1159, 16, %s1156, %s1142
        $region64: #{tpu_custom_call.1} parent=47 // pred_fallthru
          _
      $region48: #{tpu_custom_call.1} parent=5 // pred_fallthru
        _
      %p1162 = scmp.le.s32.totalorder 2, %s18
      // Predicated region
      $region65: #{tpu_custom_call.1} parent=5 // pred_check
        %p1163 = pneg %p1162
      $region66: #{tpu_custom_call.1} parent=5 // pred_check_branch
        %1165 = sbr.rel (%p1163) target = $region68
      $region67: #{tpu_custom_call.1} parent=5 // pred_region
        %s1166 = ssub.s32 %s18, 2
        // Predicated region
        $region69: #{tpu_custom_call.1} parent=67 // pred_check
          %p1167 = pneg %p215
        $region70: #{tpu_custom_call.1} parent=67 // pred_check_branch
          %1169 = sbr.rel (%p1167) target = $region72
        $region71: #{tpu_custom_call.1} parent=67 // pred_region
          %s1170 = smul.u32 32, %s30
          %p1171 = scmp.lt.s32.totalorder %s29, 1
          %s1172 = scalar_select %p1171, %s29, 1
          %p1173 = scmp.lt.s32.totalorder %s1170, 31
          %s1174 = scalar_select %p1173, %s1170, 31
          %s1175 = smul.addr %s1172, 32
          %s1176 = sadd.s32 %s1174, %s1175
          %s1177 = smul.addr %s1176, 4
          %s1178 = scalar_lea.vmem %s7, %s1177
        $region72: #{tpu_custom_call.1} parent=67 // pred_fallthru
          _
        // Predicated region
        $region73: #{tpu_custom_call.1} parent=67 // pred_check
          %p1179 = pneg %p241
        $region74: #{tpu_custom_call.1} parent=67 // pred_check_branch
          %1181 = sbr.rel (%p1179) target = $region76
        $region75: #{tpu_custom_call.1} parent=67 // pred_region
          %s1182 = sand.u32 %s226, 1
          %s1183 = scalar_lea.sflag [#allocation4], %s1182
          %s1184 = sand.u32 %s226, 1
          %s1185 = scalar_lea.vmem [#allocation3], %s1184
          %1186 = dma.done %s1183, 16
        $region76: #{tpu_custom_call.1} parent=67 // pred_fallthru
          _
      $region68: #{tpu_custom_call.1} parent=5 // pred_fallthru
        _
    $region6: #{tpu_custom_call.1} parent=1 // loop_footer
      %s22 = sadd.s32 1, %s18
    $region7: #{tpu_custom_call.1} parent=1 // loop_footer_branch
      %17 = sbr.rel target = $region3
    $region8: #{tpu_custom_call.1} parent=1 // loop_exit
      _
    %1187 = vsyncpa [#allocation4], 1
    %s1188 = scalar_lea.sflag [#allocation4], 1
    %1189 = vsyncpa %s1188, 1

</llo_original>
